<compile_context>
chip_gen: v6e
topology: v6e:2x2x1
jax: 0.10.0
libtpu: 0.0.40
codegen_flags: <defaults>
</compile_context>

<pallas_src>
import functools

import jax
import jax.numpy as jnp
from jax.experimental import pallas as pl
from jax.experimental.pallas import tpu as pltpu

LANE = 128  # TPU lane width; all feature dims are padded to multiples of this.


def _round_up(n, m):
    return ((n + m - 1) // m) * m


def _fused_mlp_kernel(x_ref, w_ref, b_ref, o_ref, *, layer_meta):
    """Whole MLP on one tile of the batch.

    x_ref : (TB, in_pad0)              f32  (features zero-padded to 128 lanes)
    w_ref : (max_in_pad, sum_out_pad)  bf16 slab; layer l at static column off.
    b_ref : (n_layers, max_out_pad)    f32  packed biases
    o_ref : (TB, out_pad_last)         f32
    layer_meta: tuple of (in_pad, out_pad, col_offset) static ints per layer.
    """
    n_layers = len(layer_meta)
    h = x_ref[...]  # f32
    for l, (in_pad, out_pad, col) in enumerate(layer_meta):
        w = w_ref[:in_pad, col:col + out_pad]          # bf16, static aligned slice
        y = jnp.dot(h.astype(jnp.bfloat16), w,
                    preferred_element_type=jnp.float32)   # MXU bf16, f32 acc
        y = y + b_ref[l:l + 1, :out_pad]               # f32 bias, broadcasts over rows
        if l != n_layers - 1:
            # sigmoid(y) == 0.5*tanh(0.5*y) + 0.5 : single EUP push + VPU FMA.
            y = 0.5 * jnp.tanh(0.5 * y) + 0.5
        h = y
    o_ref[...] = h.astype(o_ref.dtype)


def init_net_params(key, inp_shape, hidden_layers, out_units):
    """PyTorch-style params: list of (w (out,in), b (out,)) like nn.Linear."""
    dims = [inp_shape] + list(hidden_layers) + [out_units]
    params = []
    for i in range(len(dims) - 1):
        fan_in, fan_out = dims[i], dims[i + 1]
        key, kw, kb = jax.random.split(key, 3)
        bound = 1.0 / jnp.sqrt(jnp.float32(fan_in))
        w = jax.random.uniform(kw, (fan_out, fan_in), jnp.float32, -bound, bound)
        b = jax.random.uniform(kb, (fan_out,), jnp.float32, -bound, bound)
        params.append((w, b))
    return params


def prepare_params(params, inp_shape):
    """One-time host prep: transpose, zero-pad, pack into one bf16 weight slab
    and one f32 bias array. Zero-padded weight ROWS are what cancel the 0.5
    values sitting in padded activation columns (see invariant above)."""
    in_pad0 = _round_up(inp_shape, LANE)
    prev_true, prev_pad = inp_shape, in_pad0
    blocks, biases, meta = [], [], []
    col = 0
    for w, b in params:
        out_dim, in_dim = w.shape
        assert in_dim == prev_true
        out_pad = _round_up(out_dim, LANE)
        w_t = jnp.pad(w.T, ((0, prev_pad - in_dim), (0, out_pad - out_dim)))
        blocks.append(w_t)
        biases.append(jnp.pad(b, (0, out_pad - out_dim)))
        meta.append((prev_pad, out_pad, col))
        col += out_pad
        prev_true, prev_pad = out_dim, out_pad

    max_in_pad = max(m[0] for m in meta)
    max_out_pad = max(m[1] for m in meta)
    total_out = col

    w_slab = jnp.zeros((max_in_pad, total_out), jnp.float32)
    for w_t, (in_pad, out_pad, c) in zip(blocks, meta):
        w_slab = w_slab.at[:in_pad, c:c + out_pad].set(w_t)
    w_slab = w_slab.astype(jnp.bfloat16)  # MXU-native operand dtype

    b_all = jnp.zeros((len(params), max_out_pad), jnp.float32)
    for l, bvec in enumerate(biases):
        b_all = b_all.at[l, :bvec.shape[0]].set(bvec)

    return dict(w_slab=w_slab, b_all=b_all, meta=tuple(meta),
                in_pad0=in_pad0, out_pad_last=meta[-1][1])


def make_forward(prep, inp_shape, out_units, batch, *, batch_tile=256):
    """Build a jitted forward pass.

    batch < 2*batch_tile (or not divisible): gridless call, everything in VMEM.
    Otherwise: 1-D batch grid, "parallel" semantics, weights at a constant
    block (VMEM-resident across the grid), x/out tiles streamed.
    """
    meta = prep["meta"]
    in_pad0 = prep["in_pad0"]
    out_pad_last = prep["out_pad_last"]
    n_layers = len(meta)
    max_in_pad, total_out = prep["w_slab"].shape
    max_out_pad = prep["b_all"].shape[1]

    kernel = functools.partial(_fused_mlp_kernel, layer_meta=meta)

    flops = 2 * sum(batch * ip * op for ip, op, _ in meta)
    transcendentals = batch * sum(op for _, op, _ in meta[:-1])
    bytes_accessed = (batch * in_pad0 * 4 + prep["w_slab"].size * 2
                      + prep["b_all"].size * 4 + batch * out_pad_last * 4)
    cost = pl.CostEstimate(flops=flops, transcendentals=transcendentals,
                           bytes_accessed=bytes_accessed)

    use_grid = (batch % batch_tile == 0) and (batch // batch_tile >= 2)
    if use_grid:
        call = pl.pallas_call(
            kernel,
            out_shape=jax.ShapeDtypeStruct((batch, out_pad_last), jnp.float32),
            grid=(batch // batch_tile,),
            in_specs=[
                pl.BlockSpec((batch_tile, in_pad0), lambda i: (i, 0)),
                pl.BlockSpec((max_in_pad, total_out), lambda i: (0, 0)),
                pl.BlockSpec((n_layers, max_out_pad), lambda i: (0, 0)),
            ],
            out_specs=pl.BlockSpec((batch_tile, out_pad_last), lambda i: (i, 0)),
            compiler_params=pltpu.CompilerParams(
                dimension_semantics=("parallel",)),
            cost_estimate=cost,
        )
    else:
        vmem = pl.BlockSpec(memory_space=pltpu.MemorySpace.VMEM)
        call = pl.pallas_call(
            kernel,
            out_shape=jax.ShapeDtypeStruct((batch, out_pad_last), jnp.float32),
            in_specs=[vmem, vmem, vmem],
            out_specs=vmem,
            cost_estimate=cost,
        )

    @jax.jit
    def forward(w_slab, b_all, x):
        x_pad = jnp.pad(x, ((0, 0), (0, in_pad0 - inp_shape)))  # lane-dense x
        y_pad = call(x_pad, w_slab, b_all)
        return y_pad[:, :out_units]

    return forward


if __name__ == "__main__":
    # Small shapes consistent with the module: an intent-classification MLP.
    inp_shape, hidden_layers, out_units = 32, [64, 48], 10

    key = jax.random.PRNGKey(0)
    key, kx = jax.random.split(key)
    params = init_net_params(key, inp_shape, hidden_layers, out_units)
    prep = prepare_params(params, inp_shape)

    def reference(x, bf16_dots=True):
        h = x
        for i, (w, b) in enumerate(params):
            if bf16_dots:  # same operand precision as the kernel
                h = jnp.dot(h.astype(jnp.bfloat16), w.T.astype(jnp.bfloat16),
                            preferred_element_type=jnp.float32) + b
            else:
                h = h @ w.T + b
            if i != len(params) - 1:
                h = jax.nn.sigmoid(h)
        return h

    # --- small-batch latency path (gridless, fused, VMEM-resident weights) ---
    batch = 8
    x = jax.random.normal(kx, (batch, inp_shape), dtype=jnp.float32)
    forward = make_forward(prep, inp_shape, out_units, batch)
    out = jax.block_until_ready(forward(prep["w_slab"], prep["b_all"], x))
    assert out.shape == (batch, out_units)
    assert jnp.allclose(out, reference(x), atol=3e-3, rtol=3e-3)
    assert jnp.allclose(out, reference(x, bf16_dots=False), atol=5e-2, rtol=5e-2)

    # --- throughput path: batch grid axis, weights pinned to a constant block ---
    big_batch = 512
    key, kb = jax.random.split(key)
    xb = jax.random.normal(kb, (big_batch, inp_shape), dtype=jnp.float32)
    forward_big = make_forward(prep, inp_shape, out_units, big_batch,
                               batch_tile=256)
    out_b = jax.block_until_ready(forward_big(prep["w_slab"], prep["b_all"], xb))
    assert out_b.shape == (big_batch, out_units)
    assert jnp.allclose(out_b, reference(xb), atol=3e-3, rtol=3e-3)

    print("KERNEL_OK")
</pallas_src>

<mosaic_0001>
module attributes {stable_mosaic.version = 11 : i64} {
  func.func @_fused_mlp_kernel(%arg0: memref<8x128xf32, #tpu.memory_space<vmem>>, %arg1: memref<128x384xbf16, #tpu.memory_space<vmem>>, %arg2: memref<3x128xf32, #tpu.memory_space<vmem>>, %arg3: memref<8x128xf32, #tpu.memory_space<vmem>>) attributes {dimension_semantics = [], scalar_prefetch = 0 : i64, scratch_operands = 0 : i64, tpu.core_type = #tpu.core_type<tc>} {
    %c0 = arith.constant 0 : index
    %c0_0 = arith.constant 0 : index
    %0 = vector.load %arg0[%c0, %c0_0] : memref<8x128xf32, #tpu.memory_space<vmem>>, vector<8x128xf32>
    %c0_1 = arith.constant 0 : index
    %c0_2 = arith.constant 0 : index
    %1 = vector.load %arg1[%c0_1, %c0_2] : memref<128x384xbf16, #tpu.memory_space<vmem>>, vector<128x128xbf16>
    %2 = arith.truncf %0 : vector<8x128xf32> to vector<8x128xbf16>
    %cst = arith.constant dense<0.000000e+00> : vector<8x128xf32>
    %3 = tpu.matmul %2, %1, %cst {dimension_numbers = #tpu.dot_dimension_numbers<[1], [0], [0], [1], [0, 0, 1, 1], [], []>} : vector<8x128xbf16>, vector<128x128xbf16>, vector<8x128xf32> -> vector<8x128xf32>
    %c0_3 = arith.constant 0 : index
    %c0_4 = arith.constant 0 : index
    %4 = vector.load %arg2[%c0_3, %c0_4] : memref<3x128xf32, #tpu.memory_space<vmem>>, vector<1x128xf32>
    %5 = vector.broadcast %4 : vector<1x128xf32> to vector<8x128xf32>
    %6 = arith.addf %3, %5 : vector<8x128xf32>
    %cst_5 = arith.constant 5.000000e-01 : f32
    %7 = vector.broadcast %cst_5 : f32 to vector<8x128xf32>
    %8 = arith.mulf %7, %6 : vector<8x128xf32>
    %9 = math.tanh %8 : vector<8x128xf32>
    %cst_6 = arith.constant 5.000000e-01 : f32
    %10 = vector.broadcast %cst_6 : f32 to vector<8x128xf32>
    %11 = arith.mulf %10, %9 : vector<8x128xf32>
    %cst_7 = arith.constant 5.000000e-01 : f32
    %12 = vector.broadcast %cst_7 : f32 to vector<8x128xf32>
    %13 = arith.addf %11, %12 : vector<8x128xf32>
    %c0_8 = arith.constant 0 : index
    %c128 = arith.constant 128 : index
    %14 = vector.load %arg1[%c0_8, %c128] : memref<128x384xbf16, #tpu.memory_space<vmem>>, vector<128x128xbf16>
    %15 = arith.truncf %13 : vector<8x128xf32> to vector<8x128xbf16>
    %cst_9 = arith.constant dense<0.000000e+00> : vector<8x128xf32>
    %16 = tpu.matmul %15, %14, %cst_9 {dimension_numbers = #tpu.dot_dimension_numbers<[1], [0], [0], [1], [0, 0, 1, 1], [], []>} : vector<8x128xbf16>, vector<128x128xbf16>, vector<8x128xf32> -> vector<8x128xf32>
    %c1 = arith.constant 1 : index
    %c0_10 = arith.constant 0 : index
    %17 = vector.load %arg2[%c1, %c0_10] : memref<3x128xf32, #tpu.memory_space<vmem>>, vector<1x128xf32>
    %18 = vector.broadcast %17 : vector<1x128xf32> to vector<8x128xf32>
    %19 = arith.addf %16, %18 : vector<8x128xf32>
    %cst_11 = arith.constant 5.000000e-01 : f32
    %20 = vector.broadcast %cst_11 : f32 to vector<8x128xf32>
    %21 = arith.mulf %20, %19 : vector<8x128xf32>
    %22 = math.tanh %21 : vector<8x128xf32>
    %cst_12 = arith.constant 5.000000e-01 : f32
    %23 = vector.broadcast %cst_12 : f32 to vector<8x128xf32>
    %24 = arith.mulf %23, %22 : vector<8x128xf32>
    %cst_13 = arith.constant 5.000000e-01 : f32
    %25 = vector.broadcast %cst_13 : f32 to vector<8x128xf32>
    %26 = arith.addf %24, %25 : vector<8x128xf32>
    %c0_14 = arith.constant 0 : index
    %c256 = arith.constant 256 : index
    %27 = vector.load %arg1[%c0_14, %c256] : memref<128x384xbf16, #tpu.memory_space<vmem>>, vector<128x128xbf16>
    %28 = arith.truncf %26 : vector<8x128xf32> to vector<8x128xbf16>
    %cst_15 = arith.constant dense<0.000000e+00> : vector<8x128xf32>
    %29 = tpu.matmul %28, %27, %cst_15 {dimension_numbers = #tpu.dot_dimension_numbers<[1], [0], [0], [1], [0, 0, 1, 1], [], []>} : vector<8x128xbf16>, vector<128x128xbf16>, vector<8x128xf32> -> vector<8x128xf32>
    %c2 = arith.constant 2 : index
    %c0_16 = arith.constant 0 : index
    %30 = vector.load %arg2[%c2, %c0_16] : memref<3x128xf32, #tpu.memory_space<vmem>>, vector<1x128xf32>
    %31 = vector.broadcast %30 : vector<1x128xf32> to vector<8x128xf32>
    %32 = arith.addf %29, %31 : vector<8x128xf32>
    %c0_17 = arith.constant 0 : index
    %c0_18 = arith.constant 0 : index
    %33 = vector.load %arg3[%c0_17, %c0_18] : memref<8x128xf32, #tpu.memory_space<vmem>>, vector<8x128xf32>
    tpu.vector_store %arg3[%c0_17, %c0_18], %32 {strides = array<i32>} : memref<8x128xf32, #tpu.memory_space<vmem>>, vector<8x128xf32>,
    return
  }
}

</mosaic_0001>

<llo_original>
// kernel: forward.1
$region0: #{forward.1}
  #allocation0 [shape = 'u32[]', space=smem, size = 0x4, offset = 0x4, fixed_abs, tag = 'smem constant byte address 0x4 - core index']
  #allocation1 [shape = 'u32[144,128]{1,0:T(1,128)}', space=vmem, size = 0x12000, scoped, tag = 'internal scratch']
  %s0 = inlined_call_operand.vmem [shape: f32[8,128], index: 0, kind: input, shape index: {}]
  %s1 = inlined_call_operand.hbm [shape: bf16[128,384], index: 1, kind: input, shape index: {}]
  %s2 = inlined_call_operand.vmem [shape: f32[3,128], index: 2, kind: input, shape index: {}]
  %s3 = inlined_call_operand.hbm [shape: f32[8,128], index: 3, kind: output, shape index: {}]
  %s4 = sld [smem:[#allocation0]]
  $region26: #{forward.1} parent=0
    _
  %s6 = ssub.s32 1, %s4
  %s7 = scalar_select 0, %s6, %s4
  $region1: #{forward.1} parent=0
    #allocation2 [shape = 'u8[98304]{0}', space=vmem, size = 0x18000, scoped, tag = 'input window, operand 1, single buffered']
    #allocation3 [shape = 's32[1]{0}', space=sflag, size = 0x4, scoped, tag = 'scoped memory for forward.1']
    #allocation4 [shape = 's32[1]{0}', space=sflag, size = 0x4, scoped, tag = 'scoped memory for forward.1']
    #allocation5 [shape = 'u8[4096]{0}', space=vmem, size = 0x1000, scoped, tag = 'output window, operand 0, single buffered']
    %8 = vsyncpa [#allocation3], 0
    %9 = vsyncpa [#allocation4], 0
    // Predicated region
    $region2: #{forward.1} parent=1 // pred_check
      _
    $region3: #{forward.1} parent=1 // pred_check_branch
      %11 = sbr.rel (0) target = $region5
    $region4: #{forward.1} parent=1 // pred_region
      _
    $region5: #{forward.1} parent=1 // pred_fallthru
      _
    // Predicated region
    $region6: #{forward.1} parent=1 // pred_check
      _
    $region7: #{forward.1} parent=1 // pred_check_branch
      %13 = sbr.rel (0) target = $region9
    $region8: #{forward.1} parent=1 // pred_region
      %s15 = ssub.s32 3072, 3072
      %16 = vsyncadd [#allocation3], %s15
      %s17 = sshll.u32 [#allocation2], 4
      %s18 = int_to_ptr.vmem [resolvable:$true] %s17
      %23 = dma.hbm_to_vmem [thread:$0]  %s1, 3072, %s18, [#allocation3], 192, 192, 12
    $region9: #{forward.1} parent=1 // pred_fallthru
      _
    // Predicated region
    $region10: #{forward.1} parent=1 // pred_check
      _
    $region11: #{forward.1} parent=1 // pred_check_branch
      %25 = sbr.rel (0) target = $region13
    $region12: #{forward.1} parent=1 // pred_region
      _
    $region13: #{forward.1} parent=1 // pred_fallthru
      _
    // Predicated region
    $region14: #{forward.1} parent=1 // pred_check
      _
    $region15: #{forward.1} parent=1 // pred_check_branch
      %27 = sbr.rel (0) target = $region17
    $region16: #{forward.1} parent=1 // pred_region
      %28 = dma.done [#allocation3], 3072
    $region17: #{forward.1} parent=1 // pred_fallthru
      _
    %v30 = vld [vmem:[%s0] sm:$0xff]
    %v31 = vld [vmem:[#allocation2] sm:$0xf]
    %v32 = vld [vmem:[#allocation2 + $0xc] sm:$0xf]
    %v33 = vld [vmem:[#allocation2 + $0x18] sm:$0xf]
    %v34 = vld [vmem:[#allocation2 + $0x24] sm:$0xf]
    %v35 = vld [vmem:[#allocation2 + $0x30] sm:$0xf]
    %v36 = vld [vmem:[#allocation2 + $0x3c] sm:$0xf]
    %v37 = vld [vmem:[#allocation2 + $0x48] sm:$0xf]
    %v38 = vld [vmem:[#allocation2 + $0x54] sm:$0xf]
    %v39 = vld [vmem:[#allocation2 + $0x60] sm:$0xf]
    %v40 = vld [vmem:[#allocation2 + $0x6c] sm:$0xf]
    %v41 = vld [vmem:[#allocation2 + $0x78] sm:$0xf]
    %v42 = vld [vmem:[#allocation2 + $0x84] sm:$0xf]
    %v43 = vld [vmem:[#allocation2 + $0x90] sm:$0xf]
    %v44 = vld [vmem:[#allocation2 + $0x9c] sm:$0xf]
    %v45 = vld [vmem:[#allocation2 + $0xa8] sm:$0xf]
    %v46 = vld [vmem:[#allocation2 + $0xb4] sm:$0xf]
    %v47 = vpack.c.bf16 %v30, %v30
    %v48 = vld [vmem:[%s2] sm:$0x1]
    %v49 = vlaneseq
    %v50 = vshrl.u32 %v49, 7
    %v51 = vsub.s32 0, %v50
    %v52 = vrot.slane %v48, %v51
    %v69 = vunpack.c.l.b16 %v31
    %v70 = vunpack.c.l.b16 %v32
    %v71 = vunpack.c.l.b16 %v33
    %v72 = vunpack.c.l.b16 %v34
    %v73 = vunpack.c.l.b16 %v35
    %v74 = vunpack.c.l.b16 %v36
    %v75 = vunpack.c.l.b16 %v37
    %v76 = vunpack.c.l.b16 %v38
    %v77 = vunpack.c.l.b16 %v39
    %v78 = vunpack.c.l.b16 %v40
    %v79 = vunpack.c.l.b16 %v41
    %v80 = vunpack.c.l.b16 %v42
    %v81 = vunpack.c.l.b16 %v43
    %v82 = vunpack.c.l.b16 %v44
    %v83 = vunpack.c.l.b16 %v45
    %v84 = vunpack.c.l.b16 %v46
    %v85 = vpack.c.b16 %v70, %v69
    %v86 = vpack.c.b16 %v72, %v71
    %v87 = vpack.c.b16 %v74, %v73
    %v88 = vpack.c.b16 %v76, %v75
    %v89 = vpack.c.b16 %v78, %v77
    %v90 = vpack.c.b16 %v80, %v79
    %v91 = vpack.c.b16 %v82, %v81
    %v92 = vpack.c.b16 %v84, %v83
    %101 = vmatprep.subr.bf16.mxu0 0
    %102 = vmatpush1.bf16.msra.mxu0 %v92
    %103 = vmatprep.subr.bf16.mxu0 0
    %104 = vmatpush1.bf16.msra.mxu0 %v91
    %105 = vmatprep.subr.bf16.mxu0 0
    %106 = vmatpush1.bf16.msra.mxu0 %v90
    %107 = vmatprep.subr.bf16.mxu0 0
    %108 = vmatpush1.bf16.msra.mxu0 %v89
    %109 = vmatprep.subr.bf16.mxu0 0
    %110 = vmatpush1.bf16.msra.mxu0 %v88
    %111 = vmatprep.subr.bf16.mxu0 0
    %112 = vmatpush1.bf16.msra.mxu0 %v87
    %113 = vmatprep.subr.bf16.mxu0 0
    %114 = vmatpush1.bf16.msra.mxu0 %v86
    %115 = vmatprep.subr.bf16.mxu0 0
    %116 = vmatpush1.bf16.msra.mxu0 %v85
    %117 = vmatprep.subr.bf16.mxu0 0
    %118 = vmatpush2.bf16.msra.mxu0 0
    %119 = vmatprep.subr.bf16.mxu0 0
    %120 = vmatpush2.bf16.msra.mxu0 0
    %121 = vmatprep.subr.bf16.mxu0 0
    %122 = vmatpush2.bf16.msra.mxu0 0
    %123 = vmatprep.subr.bf16.mxu0 0
    %124 = vmatpush2.bf16.msra.mxu0 0
    %125 = vmatprep.subr.bf16.mxu0 0
    %126 = vmatpush2.bf16.msra.mxu0 0
    %127 = vmatprep.subr.bf16.mxu0 0
    %128 = vmatpush2.bf16.msra.mxu0 0
    %129 = vmatprep.subr.bf16.mxu0 0
    %130 = vmatpush2.bf16.msra.mxu0 0
    %131 = vmatprep.subr.bf16.mxu0 0
    %132 = vmatpush2.bf16.msra.mxu0 0
    %133 = vmatprep.mubr.bf16.mxu0 0
    %134 = vmatmul.mubr.bf16.gmra.mxu0 %v47
    %v135 = vpop.f32.mrf.mxu0
    %v136 = vadd.f32 %v52, %v135
    %v137 = vpop.f32.mrf.mxu0
    %v138 = vpop.f32.mrf.mxu0
    %v139 = vpop.f32.mrf.mxu0
    %140 = vdwg.mxu0
    %v141 = vmul.f32 %v136, 0.5
    %v142 = vtanh.pop %v141
    %v143 = vmul.f32 %v142, 0.5
    %v144 = vadd.f32 %v143, 0.5
    %v145 = vld [vmem:[#allocation2 + $0x4] sm:$0xf]
    %v146 = vld [vmem:[#allocation2 + $0x10] sm:$0xf]
    %v147 = vld [vmem:[#allocation2 + $0x1c] sm:$0xf]
    %v148 = vld [vmem:[#allocation2 + $0x28] sm:$0xf]
    %v149 = vld [vmem:[#allocation2 + $0x34] sm:$0xf]
    %v150 = vld [vmem:[#allocation2 + $0x40] sm:$0xf]
    %v151 = vld [vmem:[#allocation2 + $0x4c] sm:$0xf]
    %v152 = vld [vmem:[#allocation2 + $0x58] sm:$0xf]
    %v153 = vld [vmem:[#allocation2 + $0x64] sm:$0xf]
    %v154 = vld [vmem:[#allocation2 + $0x70] sm:$0xf]
    %v155 = vld [vmem:[#allocation2 + $0x7c] sm:$0xf]
    %v156 = vld [vmem:[#allocation2 + $0x88] sm:$0xf]
    %v157 = vld [vmem:[#allocation2 + $0x94] sm:$0xf]
    %v158 = vld [vmem:[#allocation2 + $0xa0] sm:$0xf]
    %v159 = vld [vmem:[#allocation2 + $0xac] sm:$0xf]
    %v160 = vld [vmem:[#allocation2 + $0xb8] sm:$0xf]
    %v161 = vpack.c.bf16 %v144, %v144
    %v162 = vld [vmem:[%s2 + $0x1] sm:$0x1]
    %v163 = vlaneseq
    %v164 = vshrl.u32 %v163, 7
    %v165 = vsub.s32 0, %v164
    %v166 = vrot.slane %v162, %v165
    %v183 = vunpack.c.l.b16 %v145
    %v184 = vunpack.c.l.b16 %v146
    %v185 = vunpack.c.l.b16 %v147
    %v186 = vunpack.c.l.b16 %v148
    %v187 = vunpack.c.l.b16 %v149
    %v188 = vunpack.c.l.b16 %v150
    %v189 = vunpack.c.l.b16 %v151
    %v190 = vunpack.c.l.b16 %v152
    %v191 = vunpack.c.l.b16 %v153
    %v192 = vunpack.c.l.b16 %v154
    %v193 = vunpack.c.l.b16 %v155
    %v194 = vunpack.c.l.b16 %v156
    %v195 = vunpack.c.l.b16 %v157
    %v196 = vunpack.c.l.b16 %v158
    %v197 = vunpack.c.l.b16 %v159
    %v198 = vunpack.c.l.b16 %v160
    %v199 = vpack.c.b16 %v184, %v183
    %v200 = vpack.c.b16 %v186, %v185
    %v201 = vpack.c.b16 %v188, %v187
    %v202 = vpack.c.b16 %v190, %v189
    %v203 = vpack.c.b16 %v192, %v191
    %v204 = vpack.c.b16 %v194, %v193
    %v205 = vpack.c.b16 %v196, %v195
    %v206 = vpack.c.b16 %v198, %v197
    %215 = vmatprep.subr.bf16.mxu0 0
    %216 = vmatpush1.bf16.msra.mxu0 %v206
    %217 = vmatprep.subr.bf16.mxu0 0
    %218 = vmatpush1.bf16.msra.mxu0 %v205
    %219 = vmatprep.subr.bf16.mxu0 0
    %220 = vmatpush1.bf16.msra.mxu0 %v204
    %221 = vmatprep.subr.bf16.mxu0 0
    %222 = vmatpush1.bf16.msra.mxu0 %v203
    %223 = vmatprep.subr.bf16.mxu0 0
    %224 = vmatpush1.bf16.msra.mxu0 %v202
    %225 = vmatprep.subr.bf16.mxu0 0
    %226 = vmatpush1.bf16.msra.mxu0 %v201
    %227 = vmatprep.subr.bf16.mxu0 0
    %228 = vmatpush1.bf16.msra.mxu0 %v200
    %229 = vmatprep.subr.bf16.mxu0 0
    %230 = vmatpush1.bf16.msra.mxu0 %v199
    %231 = vmatprep.subr.bf16.mxu0 0
    %232 = vmatpush2.bf16.msra.mxu0 0
    %233 = vmatprep.subr.bf16.mxu0 0
    %234 = vmatpush2.bf16.msra.mxu0 0
    %235 = vmatprep.subr.bf16.mxu0 0
    %236 = vmatpush2.bf16.msra.mxu0 0
    %237 = vmatprep.subr.bf16.mxu0 0
    %238 = vmatpush2.bf16.msra.mxu0 0
    %239 = vmatprep.subr.bf16.mxu0 0
    %240 = vmatpush2.bf16.msra.mxu0 0
    %241 = vmatprep.subr.bf16.mxu0 0
    %242 = vmatpush2.bf16.msra.mxu0 0
    %243 = vmatprep.subr.bf16.mxu0 0
    %244 = vmatpush2.bf16.msra.mxu0 0
    %245 = vmatprep.subr.bf16.mxu0 0
    %246 = vmatpush2.bf16.msra.mxu0 0
    %247 = vmatprep.mubr.bf16.mxu0 0
    %248 = vmatmul.mubr.bf16.gmra.mxu0 %v161
    %v249 = vpop.f32.mrf.mxu0
    %v250 = vadd.f32 %v166, %v249
    %v251 = vpop.f32.mrf.mxu0
    %v252 = vpop.f32.mrf.mxu0
    %v253 = vpop.f32.mrf.mxu0
    %254 = vdwg.mxu0
    %v255 = vmul.f32 %v250, 0.5
    %v256 = vtanh.pop %v255
    %v257 = vmul.f32 %v256, 0.5
    %v258 = vadd.f32 %v257, 0.5
    %v259 = vld [vmem:[#allocation2 + $0x8] sm:$0xf]
    %v260 = vld [vmem:[#allocation2 + $0x14] sm:$0xf]
    %v261 = vld [vmem:[#allocation2 + $0x20] sm:$0xf]
    %v262 = vld [vmem:[#allocation2 + $0x2c] sm:$0xf]
    %v263 = vld [vmem:[#allocation2 + $0x38] sm:$0xf]
    %v264 = vld [vmem:[#allocation2 + $0x44] sm:$0xf]
    %v265 = vld [vmem:[#allocation2 + $0x50] sm:$0xf]
    %v266 = vld [vmem:[#allocation2 + $0x5c] sm:$0xf]
    %v267 = vld [vmem:[#allocation2 + $0x68] sm:$0xf]
    %v268 = vld [vmem:[#allocation2 + $0x74] sm:$0xf]
    %v269 = vld [vmem:[#allocation2 + $0x80] sm:$0xf]
    %v270 = vld [vmem:[#allocation2 + $0x8c] sm:$0xf]
    %v271 = vld [vmem:[#allocation2 + $0x98] sm:$0xf]
    %v272 = vld [vmem:[#allocation2 + $0xa4] sm:$0xf]
    %v273 = vld [vmem:[#allocation2 + $0xb0] sm:$0xf]
    %v274 = vld [vmem:[#allocation2 + $0xbc] sm:$0xf]
    %v275 = vpack.c.bf16 %v258, %v258
    %v276 = vld [vmem:[%s2 + $0x2] sm:$0x1]
    %v277 = vlaneseq
    %v278 = vshrl.u32 %v277, 7
    %v279 = vsub.s32 0, %v278
    %v280 = vrot.slane %v276, %v279
    %v297 = vunpack.c.l.b16 %v259
    %v298 = vunpack.c.l.b16 %v260
    %v299 = vunpack.c.l.b16 %v261
    %v300 = vunpack.c.l.b16 %v262
    %v301 = vunpack.c.l.b16 %v263
    %v302 = vunpack.c.l.b16 %v264
    %v303 = vunpack.c.l.b16 %v265
    %v304 = vunpack.c.l.b16 %v266
    %v305 = vunpack.c.l.b16 %v267
    %v306 = vunpack.c.l.b16 %v268
    %v307 = vunpack.c.l.b16 %v269
    %v308 = vunpack.c.l.b16 %v270
    %v309 = vunpack.c.l.b16 %v271
    %v310 = vunpack.c.l.b16 %v272
    %v311 = vunpack.c.l.b16 %v273
    %v312 = vunpack.c.l.b16 %v274
    %v313 = vpack.c.b16 %v298, %v297
    %v314 = vpack.c.b16 %v300, %v299
    %v315 = vpack.c.b16 %v302, %v301
    %v316 = vpack.c.b16 %v304, %v303
    %v317 = vpack.c.b16 %v306, %v305
    %v318 = vpack.c.b16 %v308, %v307
    %v319 = vpack.c.b16 %v310, %v309
    %v320 = vpack.c.b16 %v312, %v311
    %329 = vmatprep.subr.bf16.mxu0 0
    %330 = vmatpush1.bf16.msra.mxu0 %v320
    %331 = vmatprep.subr.bf16.mxu0 0
    %332 = vmatpush1.bf16.msra.mxu0 %v319
    %333 = vmatprep.subr.bf16.mxu0 0
    %334 = vmatpush1.bf16.msra.mxu0 %v318
    %335 = vmatprep.subr.bf16.mxu0 0
    %336 = vmatpush1.bf16.msra.mxu0 %v317
    %337 = vmatprep.subr.bf16.mxu0 0
    %338 = vmatpush1.bf16.msra.mxu0 %v316
    %339 = vmatprep.subr.bf16.mxu0 0
    %340 = vmatpush1.bf16.msra.mxu0 %v315
    %341 = vmatprep.subr.bf16.mxu0 0
    %342 = vmatpush1.bf16.msra.mxu0 %v314
    %343 = vmatprep.subr.bf16.mxu0 0
    %344 = vmatpush1.bf16.msra.mxu0 %v313
    %345 = vmatprep.subr.bf16.mxu0 0
    %346 = vmatpush2.bf16.msra.mxu0 0
    %347 = vmatprep.subr.bf16.mxu0 0
    %348 = vmatpush2.bf16.msra.mxu0 0
    %349 = vmatprep.subr.bf16.mxu0 0
    %350 = vmatpush2.bf16.msra.mxu0 0
    %351 = vmatprep.subr.bf16.mxu0 0
    %352 = vmatpush2.bf16.msra.mxu0 0
    %353 = vmatprep.subr.bf16.mxu0 0
    %354 = vmatpush2.bf16.msra.mxu0 0
    %355 = vmatprep.subr.bf16.mxu0 0
    %356 = vmatpush2.bf16.msra.mxu0 0
    %357 = vmatprep.subr.bf16.mxu0 0
    %358 = vmatpush2.bf16.msra.mxu0 0
    %359 = vmatprep.subr.bf16.mxu0 0
    %360 = vmatpush2.bf16.msra.mxu0 0
    %361 = vmatprep.mubr.bf16.mxu0 0
    %362 = vmatmul.mubr.bf16.gmra.mxu0 %v275
    %v363 = vpop.f32.mrf.mxu0
    %v364 = vadd.f32 %v280, %v363
    %v365 = vpop.f32.mrf.mxu0
    %v366 = vpop.f32.mrf.mxu0
    %v367 = vpop.f32.mrf.mxu0
    %368 = vdwg.mxu0
    %369 = vst [vmem:[#allocation5] sm:$0xff] %v364
    // Predicated region
    $region18: #{forward.1} parent=1 // pred_check
      _
    $region19: #{forward.1} parent=1 // pred_check_branch
      %371 = sbr.rel (0) target = $region21
    $region20: #{forward.1} parent=1 // pred_region
      %s373 = ssub.s32 128, 128
      %374 = vsyncadd [#allocation4], %s373
      %s376 = sshll.u32 [#allocation5], 4
      %s377 = int_to_ptr.vmem [resolvable:$true] %s376
      %379 = dma.vmem_to_hbm [thread:$0]  %s377, 128, %s3, [#allocation4]
    $region21: #{forward.1} parent=1 // pred_fallthru
      _
    // Predicated region
    $region22: #{forward.1} parent=1 // pred_check
      _
    $region23: #{forward.1} parent=1 // pred_check_branch
      %381 = sbr.rel (0) target = $region25
    $region24: #{forward.1} parent=1 // pred_region
      %382 = dma.done [#allocation4], 128
    $region25: #{forward.1} parent=1 // pred_fallthru
      _
    %383 = vsyncpa [#allocation3], 1
    %384 = vsyncpa [#allocation4], 1

</llo_original>
